<compile_context>
chip_gen: v7x
topology: tpu7x:2x2x1
jax: 0.10.0
libtpu: 0.0.40
codegen_flags: <defaults>
</compile_context>

<pallas_src>
import functools

import jax
import jax.numpy as jnp
from jax.experimental import pallas as pl
from jax.experimental.pallas import tpu as pltpu

NUM_LAYERS = 4
LANE = 128


def _round_up(n, m):
    return (n + m - 1) // m * m


# --------------------------------------------------------------------------- #
# Kernel
# --------------------------------------------------------------------------- #
def lstm_model_kernel(x_ref, w0_ref, b0_ref, w3_ref, b3_ref, w_out_ref, b_out_ref,
                      o_ref, *, num_rest_layers):
    """One batch tile.  Matmul inputs bf16 (f32 accumulation); everything after f32.

    x_ref    : (tb, Dp)        bf16
    w0_ref   : (Dp, 3*Hp)      bf16  fused feature_embedding + layer-0, gates [i, g, o]
    b0_ref   : (1, 3*Hp)       f32
    w3_ref   : (L-1, Hp, 3*Hp) bf16  layers 1..L-1, gates [i, g, o]
    b3_ref   : (L-1, 1, 3*Hp)  f32   b_ih + b_hh
    w_out_ref: (Hp, OUT_LANE)  bf16
    b_out_ref: (1, OUT_LANE)   f32
    o_ref    : (OUT_SUB, tb)   f32   lane-packed sigmoid outputs
    """
    Hp = w_out_ref.shape[0]

    def cell(gates):
        # c_prev == 0 => c = i * g; forget gate already dropped in the weight prep.
        # (v5e note: 2 sigmoid + 2 tanh per hidden element hit the single EUP slot.)
        i_g = jax.nn.sigmoid(gates[:, 0 * Hp:1 * Hp])
        g_g = jnp.tanh(gates[:, 1 * Hp:2 * Hp])
        o_g = jax.nn.sigmoid(gates[:, 2 * Hp:3 * Hp])
        return o_g * jnp.tanh(i_g * g_g)

    # Layer 0 (feature_embedding folded in): gates = x @ W0' + b0'.
    gates = jnp.dot(x_ref[...], w0_ref[...],
                    preferred_element_type=jnp.float32) + b0_ref[...]
    h = cell(gates)

    # Layers 1 .. L-1, single time step with zero initial state.
    for layer in range(num_rest_layers):
        gates = jnp.dot(h.astype(jnp.bfloat16), w3_ref[layer],
                        preferred_element_type=jnp.float32) + b3_ref[layer]
        h = cell(gates)

    # fc_out + sigmoid, packed into lanes: transpose the logit tile (small XLU op)
    # and keep only the real (sublane-padded) output rows -> lane-dense (OUT_SUB, tb)
    # store instead of a (tb, 128) one.
    logits = jnp.dot(h.astype(jnp.bfloat16), w_out_ref[...],
                     preferred_element_type=jnp.float32) + b_out_ref[...]
    out_sub = o_ref.shape[0]
    o_ref[...] = jax.nn.sigmoid(jnp.transpose(logits)[:out_sub, :])


# --------------------------------------------------------------------------- #
# Parameter preparation
# --------------------------------------------------------------------------- #
def prepare_kernel_params(p):
    """Fold/pad f32 (in, out)-layout model params into the kernel's bf16 weight set.

    Valid ONLY for this module's forward: seq_len == 1 and zero initial LSTM state,
    so the W_hh matmul and the forget gate are mathematically dead.
    Returns (weights_dict, dims_tuple); dims_tuple is hashable (static under jit).
    """
    D, H = p["w_emb"].shape
    out_dim = p["w_out"].shape[1]
    L = p["wih"].shape[0]
    Dp = _round_up(D, 16)                 # bf16 sublane pack; no 128-lane padding needed
    Hp = _round_up(H, LANE)
    out_lane = _round_up(out_dim, LANE)
    out_sub = _round_up(out_dim, 8)

    b_gate = p["bih"] + p["bhh"]                                        # (L, 1, 4H)
    gate_sl = (slice(0, H), slice(2 * H, 3 * H), slice(3 * H, 4 * H))   # i, g, o

    def sel_pad(a, rows_to):
        """(R, 4H) -> (rows_to, 3*Hp): keep [i, g, o], pad each gate block to Hp."""
        parts = [jnp.pad(a[:, sl], ((0, rows_to - a.shape[0]), (0, Hp - H)))
                 for sl in gate_sl]
        return jnp.concatenate(parts, axis=-1)

    # Layer 0 with feature_embedding folded in (exact; f32 math, single bf16 cast).
    w0_full = p["w_emb"] @ p["wih"][0]                                  # (D, 4H)
    b0_full = p["b_emb"] @ p["wih"][0] + b_gate[0]                      # (1, 4H)
    w0 = sel_pad(w0_full, Dp).astype(jnp.bfloat16)                      # (Dp, 3Hp)
    b0 = sel_pad(b0_full, 1)                                            # (1, 3Hp) f32

    # Layers 1 .. L-1 (a zero dummy layer is kept when L == 1; it is never read).
    if L > 1:
        w_rest, b_rest = p["wih"][1:], b_gate[1:]
    else:
        w_rest = jnp.zeros((1, H, 4 * H), jnp.float32)
        b_rest = jnp.zeros((1, 1, 4 * H), jnp.float32)
    w3 = jnp.stack([sel_pad(w_rest[l], Hp) for l in range(w_rest.shape[0])]
                   ).astype(jnp.bfloat16)                               # (max(L-1,1), Hp, 3Hp)
    b3 = jnp.stack([sel_pad(b_rest[l], 1) for l in range(b_rest.shape[0])])  # (.., 1, 3Hp)

    # fc_out, lane-padded (padded columns are sliced away by the wrapper).
    w_out = jnp.pad(p["w_out"], ((0, Hp - H), (0, out_lane - out_dim))).astype(jnp.bfloat16)
    b_out = jnp.pad(p["b_out"], ((0, 0), (0, out_lane - out_dim)))      # f32

    kp = dict(w0=w0, b0=b0, w3=w3, b3=b3, w_out=w_out, b_out=b_out)
    dims = (D, out_dim, Dp, Hp, out_lane, out_sub, L)
    return kp, dims


# --------------------------------------------------------------------------- #
# Wrapper
# --------------------------------------------------------------------------- #
def _vmem_limit_bytes():
    """Per-generation VMEM budget: ~3/4 of physical, capped at 96 MiB.
    v5e/v6e (128 MiB physical) -> 96 MiB; v7x (64 MiB physical) -> 48 MiB."""
    try:
        cap = pltpu.get_tpu_info().vmem_capacity_bytes
    except Exception:
        cap = 64 * 1024 * 1024        # conservative (v7x-sized) fallback
    return min((cap // 4) * 3, 96 * 1024 * 1024)


@functools.partial(jax.jit, static_argnames=("dims", "tb"))
def lstm_model_forward(x, kp, *, dims, tb=None):
    """x: (B, input_dim) f32.  kp, dims: output of prepare_kernel_params.
    Returns (B, output_dim) f32 probabilities."""
    D, out_dim, Dp, Hp, out_lane, out_sub, L = dims
    B = x.shape[0]

    # Batch tile.  tb is the lane dim of the packed output, so it must be a multiple
    # of 128 whenever the batch is tiled (a single full-extent block is exempt).
    if tb is None:
        if B <= 128:
            tb = _round_up(B, 16)                   # one grid step, full-extent block
        else:
            tb = 512 if B > 512 else _round_up(B, 128)
            # v7x has 2 TensorCores: keep >= 2 steps on the parallel batch axis.
            if _round_up(B, tb) // tb < 2:
                tb = max(128, _round_up(tb // 2, 128))
    B_pad = _round_up(B, tb)
    n_steps = B_pad // tb
    if n_steps > 1 and tb % 128 != 0:
        raise ValueError("tb must be a multiple of 128 when the batch is tiled")

    # bf16 activation stream; input_dim padded only to the bf16 sublane pack.
    x_pad = jnp.pad(x, ((0, B_pad - B), (0, Dp - D))).astype(jnp.bfloat16)

    vmem_limit = _vmem_limit_bytes()
    weight_bytes = sum(int(a.size) * a.dtype.itemsize for a in kp.values())
    # Pallas double-buffers every input, even constant-index ones; drop the weight
    # stack to single buffering when 2x residency would crowd the VMEM budget.
    single_buffer_weights = 2 * weight_bytes > vmem_limit // 2

    def const_spec(a):
        idx = lambda i, _nd=a.ndim: (0,) * _nd
        if single_buffer_weights:
            return pl.BlockSpec(a.shape, idx, pipeline_mode=pl.Buffered(1))
        return pl.BlockSpec(a.shape, idx)

    weights = (kp["w0"], kp["b0"], kp["w3"], kp["b3"], kp["w_out"], kp["b_out"])
    in_specs = ([pl.BlockSpec((tb, Dp), lambda i: (i, 0))]
                + [const_spec(a) for a in weights])

    out_packed = pl.pallas_call(
        functools.partial(lstm_model_kernel, num_rest_layers=L - 1),
        out_shape=jax.ShapeDtypeStruct((out_sub, B_pad), jnp.float32),
        grid=(n_steps,),
        in_specs=in_specs,
        out_specs=pl.BlockSpec((out_sub, tb), lambda i: (0, i)),
        compiler_params=pltpu.CompilerParams(
            dimension_semantics=("parallel",),
            vmem_limit_bytes=vmem_limit),
    )(x_pad, *weights)

    # (out_sub, B_pad) lane-packed -> (B, out_dim)
    return out_packed[:out_dim, :B].T


# --------------------------------------------------------------------------- #
# Parameters + pure-JAX reference (full PyTorch math, f32, incl. W_hh / f-gate)
# --------------------------------------------------------------------------- #
def init_params(key, input_dim, hidden_dim, output_dim, num_layers=NUM_LAYERS):
    """Deterministic synthetic parameters; weights already transposed to (in, out).
    LSTM gate order along the 4H axis is PyTorch's [i, f, g, o]."""
    ks = jax.random.split(key, 8)
    scale = 0.1
    w_emb = scale * jax.random.normal(ks[0], (input_dim, hidden_dim), jnp.float32)
    b_emb = scale * jax.random.normal(ks[1], (1, hidden_dim), jnp.float32)
    wih = scale * jax.random.normal(ks[2], (num_layers, hidden_dim, 4 * hidden_dim), jnp.float32)
    whh = scale * jax.random.normal(ks[3], (num_layers, hidden_dim, 4 * hidden_dim), jnp.float32)
    bih = scale * jax.random.normal(ks[4], (num_layers, 1, 4 * hidden_dim), jnp.float32)
    bhh = scale * jax.random.normal(ks[5], (num_layers, 1, 4 * hidden_dim), jnp.float32)
    w_out = scale * jax.random.normal(ks[6], (hidden_dim, output_dim), jnp.float32)
    b_out = scale * jax.random.normal(ks[7], (1, output_dim), jnp.float32)
    return dict(w_emb=w_emb, b_emb=b_emb, wih=wih, whh=whh, bih=bih, bhh=bhh,
                w_out=w_out, b_out=b_out)


def reference_forward(x, p):
    """Pure-JAX f32 mirror of the PyTorch forward (keeps W_hh and the f-gate)."""
    h = x @ p["w_emb"] + p["b_emb"]
    H = p["w_emb"].shape[1]
    h_prev = jnp.zeros_like(h)
    c_prev = jnp.zeros_like(h)
    for l in range(p["wih"].shape[0]):
        g = h @ p["wih"][l] + h_prev @ p["whh"][l] + p["bih"][l] + p["bhh"][l]
        i = jax.nn.sigmoid(g[:, 0 * H:1 * H])
        f = jax.nn.sigmoid(g[:, 1 * H:2 * H])
        gg = jnp.tanh(g[:, 2 * H:3 * H])
        o = jax.nn.sigmoid(g[:, 3 * H:4 * H])
        c = f * c_prev + i * gg
        h = o * jnp.tanh(c)
    return jax.nn.sigmoid(h @ p["w_out"] + p["b_out"])


if __name__ == "__main__":
    key = jax.random.PRNGKey(0)
    k_x, k_p = jax.random.split(key)

    batch, input_dim, hidden_dim, output_dim = 8, 16, 64, 1
    x = jax.random.normal(k_x, (batch, input_dim), jnp.float32)
    params = init_params(k_p, input_dim, hidden_dim, output_dim)
    kparams, dims = prepare_kernel_params(params)

    out = lstm_model_forward(x, kparams, dims=dims)
    out = jax.block_until_ready(out)

    ref = reference_forward(x, params)
    assert out.shape == (batch, output_dim), out.shape
    err = float(jnp.max(jnp.abs(out - ref)))
    # bf16 weights/activations vs. f32 reference; sigmoid output lies in [0, 1].
    assert err < 2e-2, err
    print("KERNEL_OK")
</pallas_src>

<mosaic_0001>
module attributes {stable_mosaic.version = 11 : i64} {
  func.func @lstm_model_kernel(%arg0: i32, %arg1: memref<16x16xbf16, #tpu.memory_space<vmem>>, %arg2: memref<16x384xbf16, #tpu.memory_space<vmem>>, %arg3: memref<1x384xf32, #tpu.memory_space<vmem>>, %arg4: memref<3x128x384xbf16, #tpu.memory_space<vmem>>, %arg5: memref<3x1x384xf32, #tpu.memory_space<vmem>>, %arg6: memref<128x128xbf16, #tpu.memory_space<vmem>>, %arg7: memref<1x128xf32, #tpu.memory_space<vmem>>, %arg8: memref<8x16xf32, #tpu.memory_space<vmem>>) attributes {dimension_semantics = [#tpu.dimension_semantics<parallel>], iteration_bounds = array<i64: 1>, scalar_prefetch = 0 : i64, scratch_operands = 0 : i64, tpu.core_type = #tpu.core_type<tc>, window_params = [{transform_indices = @transform_0, window_bounds = array<i64: 16, 16>}, {pipeline_mode = #tpu.pipeline_mode<synchronous>, transform_indices = @transform_1, window_bounds = array<i64: 16, 384>}, {pipeline_mode = #tpu.pipeline_mode<synchronous>, transform_indices = @transform_2, window_bounds = array<i64: 1, 384>}, {pipeline_mode = #tpu.pipeline_mode<synchronous>, transform_indices = @transform_3, window_bounds = array<i64: 3, 128, 384>}, {pipeline_mode = #tpu.pipeline_mode<synchronous>, transform_indices = @transform_4, window_bounds = array<i64: 3, 1, 384>}, {pipeline_mode = #tpu.pipeline_mode<synchronous>, transform_indices = @transform_5, window_bounds = array<i64: 128, 128>}, {pipeline_mode = #tpu.pipeline_mode<synchronous>, transform_indices = @transform_6, window_bounds = array<i64: 1, 128>}, {transform_indices = @transform_7, window_bounds = array<i64: 8, 16>}]} {
    %c0 = arith.constant 0 : index
    %c0_0 = arith.constant 0 : index
    %0 = vector.load %arg1[%c0, %c0_0] : memref<16x16xbf16, #tpu.memory_space<vmem>>, vector<16x16xbf16>
    %c0_1 = arith.constant 0 : index
    %c0_2 = arith.constant 0 : index
    %1 = vector.load %arg2[%c0_1, %c0_2] : memref<16x384xbf16, #tpu.memory_space<vmem>>, vector<16x384xbf16>
    %cst = arith.constant dense<0.000000e+00> : vector<16x384xf32>
    %2 = tpu.matmul %0, %1, %cst {dimension_numbers = #tpu.dot_dimension_numbers<[1], [0], [0], [1], [0, 0, 1, 1], [], []>} : vector<16x16xbf16>, vector<16x384xbf16>, vector<16x384xf32> -> vector<16x384xf32>
    %c0_3 = arith.constant 0 : index
    %c0_4 = arith.constant 0 : index
    %3 = vector.load %arg3[%c0_3, %c0_4] : memref<1x384xf32, #tpu.memory_space<vmem>>, vector<1x384xf32>
    %4 = vector.broadcast %3 : vector<1x384xf32> to vector<16x384xf32>
    %5 = arith.addf %2, %4 : vector<16x384xf32>
    %6 = vector.extract_strided_slice %5 {offsets = [0, 0], sizes = [16, 128], strides = [1, 1]} : vector<16x384xf32> to vector<16x128xf32>
    %7 = arith.negf %6 : vector<16x128xf32>
    %8 = math.exp %7 : vector<16x128xf32>
    %cst_5 = arith.constant 1.000000e+00 : f32
    %9 = vector.broadcast %cst_5 : f32 to vector<16x128xf32>
    %10 = arith.addf %9, %8 : vector<16x128xf32>
    %11 = arith.divf %9, %10 : vector<16x128xf32>
    %12 = vector.extract_strided_slice %5 {offsets = [0, 128], sizes = [16, 128], strides = [1, 1]} : vector<16x384xf32> to vector<16x128xf32>
    %13 = math.tanh %12 : vector<16x128xf32>
    %14 = vector.extract_strided_slice %5 {offsets = [0, 256], sizes = [16, 128], strides = [1, 1]} : vector<16x384xf32> to vector<16x128xf32>
    %15 = arith.negf %14 : vector<16x128xf32>
    %16 = math.exp %15 : vector<16x128xf32>
    %cst_6 = arith.constant 1.000000e+00 : f32
    %17 = vector.broadcast %cst_6 : f32 to vector<16x128xf32>
    %18 = arith.addf %17, %16 : vector<16x128xf32>
    %19 = arith.divf %17, %18 : vector<16x128xf32>
    %20 = arith.mulf %11, %13 : vector<16x128xf32>
    %21 = math.tanh %20 : vector<16x128xf32>
    %22 = arith.mulf %19, %21 : vector<16x128xf32>
    %23 = arith.truncf %22 : vector<16x128xf32> to vector<16x128xbf16>
    %c0_7 = arith.constant 0 : index
    %c0_8 = arith.constant 0 : index
    %c0_9 = arith.constant 0 : index
    %24 = vector.load %arg4[%c0_7, %c0_8, %c0_9] : memref<3x128x384xbf16, #tpu.memory_space<vmem>>, vector<1x128x384xbf16>
    %25 = vector.shape_cast %24 : vector<1x128x384xbf16> to vector<128x384xbf16>
    %cst_10 = arith.constant dense<0.000000e+00> : vector<16x384xf32>
    %26 = tpu.matmul %23, %25, %cst_10 {dimension_numbers = #tpu.dot_dimension_numbers<[1], [0], [0], [1], [0, 0, 1, 1], [], []>} : vector<16x128xbf16>, vector<128x384xbf16>, vector<16x384xf32> -> vector<16x384xf32>
    %c0_11 = arith.constant 0 : index
    %c0_12 = arith.constant 0 : index
    %c0_13 = arith.constant 0 : index
    %27 = vector.load %arg5[%c0_11, %c0_12, %c0_13] : memref<3x1x384xf32, #tpu.memory_space<vmem>>, vector<1x1x384xf32>
    %28 = vector.shape_cast %27 : vector<1x1x384xf32> to vector<1x384xf32>
    %29 = vector.broadcast %28 : vector<1x384xf32> to vector<16x384xf32>
    %30 = arith.addf %26, %29 : vector<16x384xf32>
    %31 = vector.extract_strided_slice %30 {offsets = [0, 0], sizes = [16, 128], strides = [1, 1]} : vector<16x384xf32> to vector<16x128xf32>
    %32 = arith.negf %31 : vector<16x128xf32>
    %33 = math.exp %32 : vector<16x128xf32>
    %cst_14 = arith.constant 1.000000e+00 : f32
    %34 = vector.broadcast %cst_14 : f32 to vector<16x128xf32>
    %35 = arith.addf %34, %33 : vector<16x128xf32>
    %36 = arith.divf %34, %35 : vector<16x128xf32>
    %37 = vector.extract_strided_slice %30 {offsets = [0, 128], sizes = [16, 128], strides = [1, 1]} : vector<16x384xf32> to vector<16x128xf32>
    %38 = math.tanh %37 : vector<16x128xf32>
    %39 = vector.extract_strided_slice %30 {offsets = [0, 256], sizes = [16, 128], strides = [1, 1]} : vector<16x384xf32> to vector<16x128xf32>
    %40 = arith.negf %39 : vector<16x128xf32>
    %41 = math.exp %40 : vector<16x128xf32>
    %cst_15 = arith.constant 1.000000e+00 : f32
    %42 = vector.broadcast %cst_15 : f32 to vector<16x128xf32>
    %43 = arith.addf %42, %41 : vector<16x128xf32>
    %44 = arith.divf %42, %43 : vector<16x128xf32>
    %45 = arith.mulf %36, %38 : vector<16x128xf32>
    %46 = math.tanh %45 : vector<16x128xf32>
    %47 = arith.mulf %44, %46 : vector<16x128xf32>
    %48 = arith.truncf %47 : vector<16x128xf32> to vector<16x128xbf16>
    %c1 = arith.constant 1 : index
    %c0_16 = arith.constant 0 : index
    %c0_17 = arith.constant 0 : index
    %49 = vector.load %arg4[%c1, %c0_16, %c0_17] : memref<3x128x384xbf16, #tpu.memory_space<vmem>>, vector<1x128x384xbf16>
    %50 = vector.shape_cast %49 : vector<1x128x384xbf16> to vector<128x384xbf16>
    %cst_18 = arith.constant dense<0.000000e+00> : vector<16x384xf32>
    %51 = tpu.matmul %48, %50, %cst_18 {dimension_numbers = #tpu.dot_dimension_numbers<[1], [0], [0], [1], [0, 0, 1, 1], [], []>} : vector<16x128xbf16>, vector<128x384xbf16>, vector<16x384xf32> -> vector<16x384xf32>
    %c1_19 = arith.constant 1 : index
    %c0_20 = arith.constant 0 : index
    %c0_21 = arith.constant 0 : index
    %52 = vector.load %arg5[%c1_19, %c0_20, %c0_21] : memref<3x1x384xf32, #tpu.memory_space<vmem>>, vector<1x1x384xf32>
    %53 = vector.shape_cast %52 : vector<1x1x384xf32> to vector<1x384xf32>
    %54 = vector.broadcast %53 : vector<1x384xf32> to vector<16x384xf32>
    %55 = arith.addf %51, %54 : vector<16x384xf32>
    %56 = vector.extract_strided_slice %55 {offsets = [0, 0], sizes = [16, 128], strides = [1, 1]} : vector<16x384xf32> to vector<16x128xf32>
    %57 = arith.negf %56 : vector<16x128xf32>
    %58 = math.exp %57 : vector<16x128xf32>
    %cst_22 = arith.constant 1.000000e+00 : f32
    %59 = vector.broadcast %cst_22 : f32 to vector<16x128xf32>
    %60 = arith.addf %59, %58 : vector<16x128xf32>
    %61 = arith.divf %59, %60 : vector<16x128xf32>
    %62 = vector.extract_strided_slice %55 {offsets = [0, 128], sizes = [16, 128], strides = [1, 1]} : vector<16x384xf32> to vector<16x128xf32>
    %63 = math.tanh %62 : vector<16x128xf32>
    %64 = vector.extract_strided_slice %55 {offsets = [0, 256], sizes = [16, 128], strides = [1, 1]} : vector<16x384xf32> to vector<16x128xf32>
    %65 = arith.negf %64 : vector<16x128xf32>
    %66 = math.exp %65 : vector<16x128xf32>
    %cst_23 = arith.constant 1.000000e+00 : f32
    %67 = vector.broadcast %cst_23 : f32 to vector<16x128xf32>
    %68 = arith.addf %67, %66 : vector<16x128xf32>
    %69 = arith.divf %67, %68 : vector<16x128xf32>
    %70 = arith.mulf %61, %63 : vector<16x128xf32>
    %71 = math.tanh %70 : vector<16x128xf32>
    %72 = arith.mulf %69, %71 : vector<16x128xf32>
    %73 = arith.truncf %72 : vector<16x128xf32> to vector<16x128xbf16>
    %c2 = arith.constant 2 : index
    %c0_24 = arith.constant 0 : index
    %c0_25 = arith.constant 0 : index
    %74 = vector.load %arg4[%c2, %c0_24, %c0_25] : memref<3x128x384xbf16, #tpu.memory_space<vmem>>, vector<1x128x384xbf16>
    %75 = vector.shape_cast %74 : vector<1x128x384xbf16> to vector<128x384xbf16>
    %cst_26 = arith.constant dense<0.000000e+00> : vector<16x384xf32>
    %76 = tpu.matmul %73, %75, %cst_26 {dimension_numbers = #tpu.dot_dimension_numbers<[1], [0], [0], [1], [0, 0, 1, 1], [], []>} : vector<16x128xbf16>, vector<128x384xbf16>, vector<16x384xf32> -> vector<16x384xf32>
    %c2_27 = arith.constant 2 : index
    %c0_28 = arith.constant 0 : index
    %c0_29 = arith.constant 0 : index
    %77 = vector.load %arg5[%c2_27, %c0_28, %c0_29] : memref<3x1x384xf32, #tpu.memory_space<vmem>>, vector<1x1x384xf32>
    %78 = vector.shape_cast %77 : vector<1x1x384xf32> to vector<1x384xf32>
    %79 = vector.broadcast %78 : vector<1x384xf32> to vector<16x384xf32>
    %80 = arith.addf %76, %79 : vector<16x384xf32>
    %81 = vector.extract_strided_slice %80 {offsets = [0, 0], sizes = [16, 128], strides = [1, 1]} : vector<16x384xf32> to vector<16x128xf32>
    %82 = arith.negf %81 : vector<16x128xf32>
    %83 = math.exp %82 : vector<16x128xf32>
    %cst_30 = arith.constant 1.000000e+00 : f32
    %84 = vector.broadcast %cst_30 : f32 to vector<16x128xf32>
    %85 = arith.addf %84, %83 : vector<16x128xf32>
    %86 = arith.divf %84, %85 : vector<16x128xf32>
    %87 = vector.extract_strided_slice %80 {offsets = [0, 128], sizes = [16, 128], strides = [1, 1]} : vector<16x384xf32> to vector<16x128xf32>
    %88 = math.tanh %87 : vector<16x128xf32>
    %89 = vector.extract_strided_slice %80 {offsets = [0, 256], sizes = [16, 128], strides = [1, 1]} : vector<16x384xf32> to vector<16x128xf32>
    %90 = arith.negf %89 : vector<16x128xf32>
    %91 = math.exp %90 : vector<16x128xf32>
    %cst_31 = arith.constant 1.000000e+00 : f32
    %92 = vector.broadcast %cst_31 : f32 to vector<16x128xf32>
    %93 = arith.addf %92, %91 : vector<16x128xf32>
    %94 = arith.divf %92, %93 : vector<16x128xf32>
    %95 = arith.mulf %86, %88 : vector<16x128xf32>
    %96 = math.tanh %95 : vector<16x128xf32>
    %97 = arith.mulf %94, %96 : vector<16x128xf32>
    %98 = arith.truncf %97 : vector<16x128xf32> to vector<16x128xbf16>
    %c0_32 = arith.constant 0 : index
    %c0_33 = arith.constant 0 : index
    %99 = vector.load %arg6[%c0_32, %c0_33] : memref<128x128xbf16, #tpu.memory_space<vmem>>, vector<128x128xbf16>
    %cst_34 = arith.constant dense<0.000000e+00> : vector<16x128xf32>
    %100 = tpu.matmul %98, %99, %cst_34 {dimension_numbers = #tpu.dot_dimension_numbers<[1], [0], [0], [1], [0, 0, 1, 1], [], []>} : vector<16x128xbf16>, vector<128x128xbf16>, vector<16x128xf32> -> vector<16x128xf32>
    %c0_35 = arith.constant 0 : index
    %c0_36 = arith.constant 0 : index
    %101 = vector.load %arg7[%c0_35, %c0_36] : memref<1x128xf32, #tpu.memory_space<vmem>>, vector<1x128xf32>
    %102 = vector.broadcast %101 : vector<1x128xf32> to vector<16x128xf32>
    %103 = arith.addf %100, %102 : vector<16x128xf32>
    %104 = tpu.transpose %103, [1, 0] : vector<16x128xf32> -> vector<128x16xf32>
    %105 = vector.extract_strided_slice %104 {offsets = [0, 0], sizes = [8, 16], strides = [1, 1]} : vector<128x16xf32> to vector<8x16xf32>
    %106 = arith.negf %105 : vector<8x16xf32>
    %107 = math.exp %106 : vector<8x16xf32>
    %cst_37 = arith.constant 1.000000e+00 : f32
    %108 = vector.broadcast %cst_37 : f32 to vector<8x16xf32>
    %109 = arith.addf %108, %107 : vector<8x16xf32>
    %110 = arith.divf %108, %109 : vector<8x16xf32>
    %c0_38 = arith.constant 0 : index
    %c0_39 = arith.constant 0 : index
    %111 = vector.load %arg8[%c0_38, %c0_39] : memref<8x16xf32, #tpu.memory_space<vmem>>, vector<8x16xf32>
    tpu.vector_store %arg8[%c0_38, %c0_39], %110 {strides = array<i32>} : memref<8x16xf32, #tpu.memory_space<vmem>>, vector<8x16xf32>,
    return
  }
  func.func @transform_0(%arg0: i32) -> (i32, i32) {
    %c0_i32 = arith.constant 0 : i32
    %c0_i32_0 = arith.constant 0 : i32
    return %arg0, %c0_i32 : i32, i32
  }
  func.func @transform_1(%arg0: i32) -> (i32, i32) {
    %c0_i32 = arith.constant 0 : i32
    %c0_i32_0 = arith.constant 0 : i32
    %c0_i32_1 = arith.constant 0 : i32
    return %c0_i32, %c0_i32_0 : i32, i32
  }
  func.func @transform_2(%arg0: i32) -> (i32, i32) {
    %c0_i32 = arith.constant 0 : i32
    %c0_i32_0 = arith.constant 0 : i32
    %c0_i32_1 = arith.constant 0 : i32
    return %c0_i32, %c0_i32_0 : i32, i32
  }
  func.func @transform_3(%arg0: i32) -> (i32, i32, i32) {
    %c0_i32 = arith.constant 0 : i32
    %c0_i32_0 = arith.constant 0 : i32
    %c0_i32_1 = arith.constant 0 : i32
    %c0_i32_2 = arith.constant 0 : i32
    return %c0_i32, %c0_i32_0, %c0_i32_1 : i32, i32, i32
  }
  func.func @transform_4(%arg0: i32) -> (i32, i32, i32) {
    %c0_i32 = arith.constant 0 : i32
    %c0_i32_0 = arith.constant 0 : i32
    %c0_i32_1 = arith.constant 0 : i32
    %c0_i32_2 = arith.constant 0 : i32
    return %c0_i32, %c0_i32_0, %c0_i32_1 : i32, i32, i32
  }
  func.func @transform_5(%arg0: i32) -> (i32, i32) {
    %c0_i32 = arith.constant 0 : i32
    %c0_i32_0 = arith.constant 0 : i32
    %c0_i32_1 = arith.constant 0 : i32
    return %c0_i32, %c0_i32_0 : i32, i32
  }
  func.func @transform_6(%arg0: i32) -> (i32, i32) {
    %c0_i32 = arith.constant 0 : i32
    %c0_i32_0 = arith.constant 0 : i32
    %c0_i32_1 = arith.constant 0 : i32
    return %c0_i32, %c0_i32_0 : i32, i32
  }
  func.func @transform_7(%arg0: i32) -> (i32, i32) {
    %c0_i32 = arith.constant 0 : i32
    %c0_i32_0 = arith.constant 0 : i32
    return %c0_i32, %arg0 : i32, i32
  }
}

</mosaic_0001>

<llo_original>
// kernel: lstm_model_forward.1
$region0: #{lstm_model_forward.1}
  #allocation0 [shape = 'u32[]', space=smem, size = 0x4, offset = 0x4, fixed_abs, tag = 'smem constant byte address 0x4 - core index']
  #allocation1 [shape = 'u32[144,128]{1,0:T(1,128)}', space=vmem, size = 0x12000, scoped, tag = 'internal scratch']
  %s0 = inlined_call_operand.vmem [shape: bf16[16,16], index: 0, kind: input, shape index: {}]
  %s1 = inlined_call_operand.vmem [shape: bf16[16,384], index: 1, kind: input, shape index: {}]
  %s2 = inlined_call_operand.vmem [shape: f32[1,384], index: 2, kind: input, shape index: {}]
  %s3 = inlined_call_operand.hbm [shape: bf16[3,128,384], index: 3, kind: input, shape index: {}]
  %s4 = inlined_call_operand.vmem [shape: f32[3,1,384], index: 4, kind: input, shape index: {}]
  %s5 = inlined_call_operand.hbm [shape: bf16[128,128], index: 5, kind: input, shape index: {}]
  %s6 = inlined_call_operand.vmem [shape: f32[1,128], index: 6, kind: input, shape index: {}]
  %s7 = inlined_call_operand.vmem [shape: f32[8,16], index: 7, kind: output, shape index: {}]
  %s8 = sld [smem:[#allocation0]]
  $region46: #{lstm_model_forward.1} parent=0
    _
  %s10 = ssub.s32 1, %s8
  %s11 = scalar_select 0, %s10, %s8
  $region1: #{lstm_model_forward.1} parent=0
    #allocation2 [shape = 'u8[294912]{0}', space=vmem, size = 0x48000, scoped, tag = 'input window, operand 3, single buffered']
    #allocation3 [shape = 's32[1]{0}', space=sflag, size = 0x4, scoped, tag = 'scoped memory for lstm_model_forward.1']
    #allocation4 [shape = 'u8[32768]{0}', space=vmem, size = 0x8000, scoped, tag = 'input window, operand 5, single buffered']
    #allocation5 [shape = 's32[1]{0}', space=sflag, size = 0x4, scoped, tag = 'scoped memory for lstm_model_forward.1']
    %12 = vsyncpa [#allocation3], 0
    %13 = vsyncpa [#allocation5], 0
    // Predicated region
    $region2: #{lstm_model_forward.1} parent=1 // pred_check
      _
    $region3: #{lstm_model_forward.1} parent=1 // pred_check_branch
      %15 = sbr.rel (0) target = $region5
    $region4: #{lstm_model_forward.1} parent=1 // pred_region
      _
    $region5: #{lstm_model_forward.1} parent=1 // pred_fallthru
      _
    // Predicated region
    $region6: #{lstm_model_forward.1} parent=1 // pred_check
      _
    $region7: #{lstm_model_forward.1} parent=1 // pred_check_branch
      %17 = sbr.rel (0) target = $region9
    $region8: #{lstm_model_forward.1} parent=1 // pred_region
      _
    $region9: #{lstm_model_forward.1} parent=1 // pred_fallthru
      _
    // Predicated region
    $region10: #{lstm_model_forward.1} parent=1 // pred_check
      _
    $region11: #{lstm_model_forward.1} parent=1 // pred_check_branch
      %19 = sbr.rel (0) target = $region13
    $region12: #{lstm_model_forward.1} parent=1 // pred_region
      _
    $region13: #{lstm_model_forward.1} parent=1 // pred_fallthru
      _
    // Predicated region
    $region14: #{lstm_model_forward.1} parent=1 // pred_check
      _
    $region15: #{lstm_model_forward.1} parent=1 // pred_check_branch
      %21 = sbr.rel (0) target = $region17
    $region16: #{lstm_model_forward.1} parent=1 // pred_region
      %s23 = ssub.s32 9216, 9216
      %24 = vsyncadd [#allocation3], %s23
      %s25 = sshll.u32 [#allocation2], 4
      %s26 = int_to_ptr.vmem [resolvable:$true] %s25
      %31 = dma.hbm_to_vmem [thread:$0]  %s3, 9216, %s26, [#allocation3], 192, 192, 12
    $region17: #{lstm_model_forward.1} parent=1 // pred_fallthru
      _
    // Predicated region
    $region18: #{lstm_model_forward.1} parent=1 // pred_check
      _
    $region19: #{lstm_model_forward.1} parent=1 // pred_check_branch
      %33 = sbr.rel (0) target = $region21
    $region20: #{lstm_model_forward.1} parent=1 // pred_region
      _
    $region21: #{lstm_model_forward.1} parent=1 // pred_fallthru
      _
    // Predicated region
    $region22: #{lstm_model_forward.1} parent=1 // pred_check
      _
    $region23: #{lstm_model_forward.1} parent=1 // pred_check_branch
      %35 = sbr.rel (0) target = $region25
    $region24: #{lstm_model_forward.1} parent=1 // pred_region
      %s37 = ssub.s32 1024, 1024
      %38 = vsyncadd [#allocation5], %s37
      %s39 = sshll.u32 [#allocation4], 4
      %s40 = int_to_ptr.vmem [resolvable:$true] %s39
      %45 = dma.hbm_to_vmem [thread:$0]  %s5, 1024, %s40, [#allocation5], 64, 64, 4
    $region25: #{lstm_model_forward.1} parent=1 // pred_fallthru
      _
    // Predicated region
    $region26: #{lstm_model_forward.1} parent=1 // pred_check
      _
    $region27: #{lstm_model_forward.1} parent=1 // pred_check_branch
      %47 = sbr.rel (0) target = $region29
    $region28: #{lstm_model_forward.1} parent=1 // pred_region
      _
    $region29: #{lstm_model_forward.1} parent=1 // pred_fallthru
      _
    // Predicated region
    $region30: #{lstm_model_forward.1} parent=1 // pred_check
      _
    $region31: #{lstm_model_forward.1} parent=1 // pred_check_branch
      %49 = sbr.rel (0) target = $region33
    $region32: #{lstm_model_forward.1} parent=1 // pred_region
      %50 = dma.done [#allocation3], 9216
    $region33: #{lstm_model_forward.1} parent=1 // pred_fallthru
      _
    // Predicated region
    $region34: #{lstm_model_forward.1} parent=1 // pred_check
      _
    $region35: #{lstm_model_forward.1} parent=1 // pred_check_branch
      %52 = sbr.rel (0) target = $region37
    $region36: #{lstm_model_forward.1} parent=1 // pred_region
      %53 = dma.done [#allocation5], 1024
    $region37: #{lstm_model_forward.1} parent=1 // pred_fallthru
      _
    %v55 = vld [vmem:[%s0] sm:$0xf]
    %v56 = vld [vmem:[%s0 + $0x4] sm:$0xf]
    %v57 = vld [vmem:[%s1] sm:$0xff]
    %v58 = vld [vmem:[%s1 + $0x8] sm:$0xf]
    %v59 = vld [vmem:[%s1 + $0xc] sm:$0xff]
    %v60 = vld [vmem:[%s1 + $0x14] sm:$0xf]
    %v61 = vld [vmem:[%s2] sm:$0x7]
    %v63 = vlaneseq
    %v64 = vshrl.u32 %v63, 7
    %v65 = vsub.s32 0, %v64
    %v66 = vrot.slane %v61, %v65
    %v67 = vlaneseq
    %v68 = vshrl.u32 %v67, 7
    %v69 = vsub.s32 1, %v68
    %v70 = vrot.slane %v61, %v69
    %v71 = vlaneseq
    %v72 = vshrl.u32 %v71, 7
    %v73 = vsub.s32 2, %v72
    %v74 = vrot.slane %v61, %v73
    %v80 = vunpack.c.l.b16 %v55
    %v81 = vunpack.c.l.b16 %v56
    %v82 = vpack.c.b16 %v81, %v80
    %v87 = vunpack.c.l.b16 %v57
    %v88 = vunpack.c.h.b16 %v57
    %v89 = vunpack.c.l.b16 %v58
    %v90 = vunpack.c.l.b16 %v59
    %v91 = vunpack.c.h.b16 %v59
    %v92 = vunpack.c.l.b16 %v60
    %v93 = vpack.c.b16 %v90, %v87
    %v94 = vpack.c.b16 %v91, %v88
    %v95 = vpack.c.b16 %v92, %v89
    %vm99 = vcmask 130048
    %v101 = vsel %vm99, %v82, 0
    %103 = vmatprep.subr.bf16.mxu0 %v94
    %104 = vmatpush1.bf16.msra.mxu0 %v93
    %105 = vmatprep.subr.bf16.mxu0 0
    %106 = vmatpush1.bf16.msra.mxu0 0
    %107 = vmatprep.subr.bf16.mxu0 0
    %108 = vmatpush1.bf16.msra.mxu0 0
    %109 = vmatprep.subr.bf16.mxu0 0
    %110 = vmatpush1.bf16.msra.mxu0 0
    %111 = vmatprep.subr.bf16.mxu0 0
    %112 = vmatpush1.bf16.msra.mxu0 0
    %113 = vmatprep.subr.bf16.mxu0 0
    %114 = vmatpush1.bf16.msra.mxu0 0
    %115 = vmatprep.subr.bf16.mxu0 0
    %116 = vmatpush1.bf16.msra.mxu0 0
    %117 = vmatprep.subr.bf16.mxu0 0
    %118 = vmatpush1.bf16.msra.mxu0 0
    %119 = vmatprep.subr.bf16.mxu0 0
    %120 = vmatpush1.bf16.msra.mxu0 0
    %121 = vmatprep.subr.bf16.mxu0 0
    %122 = vmatpush1.bf16.msra.mxu0 0
    %123 = vmatprep.subr.bf16.mxu0 0
    %124 = vmatpush1.bf16.msra.mxu0 0
    %125 = vmatprep.subr.bf16.mxu0 0
    %126 = vmatpush1.bf16.msra.mxu0 0
    %127 = vmatprep.subr.bf16.mxu0 0
    %128 = vmatpush1.bf16.msra.mxu0 0
    %129 = vmatprep.subr.bf16.mxu0 0
    %130 = vmatpush1.bf16.msra.mxu0 0
    %131 = vmatprep.subr.bf16.mxu0 0
    %132 = vmatpush1.bf16.msra.mxu0 0
    %133 = vmatprep.subr.bf16.mxu0 0
    %134 = vmatpush1.bf16.msra.mxu0 0
    %135 = vmatprep.mubr.bf16.mxu0 0
    %136 = vmatmul.mubr.bf16.gmra.mrb[0].mxu0 %v101
    %v137 = vpop.f32.mrb[0].mxu0
    %v138 = vadd.f32 %v66, %v137
    %v139 = vpop.f32.mrb[0].mxu0
    %v140 = vadd.f32 %v70, %v139
    %v141 = vpop.f32.mrb[0].mxu0
    %v142 = vadd.f32 %v66, %v141
    %v143 = vpop.f32.mrb[0].mxu0
    %v144 = vadd.f32 %v70, %v143
    %145 = vdwg.mxu0
    %146 = vmatprep.subr.bf16.mxu0 0
    %147 = vmatpush1.bf16.msra.mxu0 %v95
    %148 = vmatprep.subr.bf16.mxu0 0
    %149 = vmatpush1.bf16.msra.mxu0 0
    %150 = vmatprep.subr.bf16.mxu0 0
    %151 = vmatpush1.bf16.msra.mxu0 0
    %152 = vmatprep.subr.bf16.mxu0 0
    %153 = vmatpush1.bf16.msra.mxu0 0
    %154 = vmatprep.subr.bf16.mxu0 0
    %155 = vmatpush1.bf16.msra.mxu0 0
    %156 = vmatprep.subr.bf16.mxu0 0
    %157 = vmatpush1.bf16.msra.mxu0 0
    %158 = vmatprep.subr.bf16.mxu0 0
    %159 = vmatpush1.bf16.msra.mxu0 0
    %160 = vmatprep.subr.bf16.mxu0 0
    %161 = vmatpush1.bf16.msra.mxu0 0
    %162 = vmatprep.subr.bf16.mxu0 0
    %163 = vmatpush1.bf16.msra.mxu0 0
    %164 = vmatprep.subr.bf16.mxu0 0
    %165 = vmatpush1.bf16.msra.mxu0 0
    %166 = vmatprep.subr.bf16.mxu0 0
    %167 = vmatpush1.bf16.msra.mxu0 0
    %168 = vmatprep.subr.bf16.mxu0 0
    %169 = vmatpush1.bf16.msra.mxu0 0
    %170 = vmatprep.subr.bf16.mxu0 0
    %171 = vmatpush1.bf16.msra.mxu0 0
    %172 = vmatprep.subr.bf16.mxu0 0
    %173 = vmatpush1.bf16.msra.mxu0 0
    %174 = vmatprep.subr.bf16.mxu0 0
    %175 = vmatpush1.bf16.msra.mxu0 0
    %176 = vmatprep.subr.bf16.mxu0 0
    %177 = vmatpush1.bf16.msra.mxu0 0
    %178 = vmatprep.mubr.bf16.mxu0 0
    %179 = vmatmul.mubr.bf16.gmra.mrb[0].mxu0 %v101
    %v180 = vpop.f32.mrb[0].mxu0
    %v181 = vadd.f32 %v74, %v180
    %v182 = vpop.f32.mrb[0].mxu0
    %v183 = vpop.f32.mrb[0].mxu0
    %v184 = vadd.f32 %v74, %v183
    %v185 = vpop.f32.mrb[0].mxu0
    %186 = vdwg.mxu0
    %v187 = vxor.u32 %v138, 2147483648
    %v188 = vxor.u32 %v142, 2147483648
    %v189 = vmul.f32 %v187, 1.442695
    %v190 = vpow.pop %v189
    %v191 = vmul.f32 %v188, 1.442695
    %v192 = vpow.pop %v191
    %v193 = vadd.f32 %v190, 1.0
    %v194 = vadd.f32 %v192, 1.0
    %v195 = vrcp.pop %v193
    %v196 = vmul.f32 1.0, %v195
    %v197 = vrcp.pop %v194
    %v198 = vmul.f32 1.0, %v197
    %v199 = vtanh.pop %v140
    %v200 = vtanh.pop %v144
    %v201 = vxor.u32 %v181, 2147483648
    %v202 = vxor.u32 %v184, 2147483648
    %v203 = vmul.f32 %v201, 1.442695
    %v204 = vpow.pop %v203
    %v205 = vmul.f32 %v202, 1.442695
    %v206 = vpow.pop %v205
    %v207 = vadd.f32 %v204, 1.0
    %v208 = vadd.f32 %v206, 1.0
    %v209 = vrcp.pop %v207
    %v210 = vmul.f32 1.0, %v209
    %v211 = vrcp.pop %v208
    %v212 = vmul.f32 1.0, %v211
    %v213 = vmul.f32 %v196, %v199
    %v214 = vmul.f32 %v198, %v200
    %v215 = vtanh.pop %v213
    %v216 = vtanh.pop %v214
    %v217 = vmul.f32 %v210, %v215
    %v218 = vmul.f32 %v212, %v216
    %v219 = vpack.c.bf16 %v218, %v217
    %v220 = vld [vmem:[#allocation2] sm:$0xff]
    %v221 = vld [vmem:[#allocation2 + $0x8] sm:$0xf]
    %v222 = vld [vmem:[#allocation2 + $0xc] sm:$0xff]
    %v223 = vld [vmem:[#allocation2 + $0x14] sm:$0xf]
    %v224 = vld [vmem:[#allocation2 + $0x18] sm:$0xff]
    %v225 = vld [vmem:[#allocation2 + $0x20] sm:$0xf]
    %v226 = vld [vmem:[#allocation2 + $0x24] sm:$0xff]
    %v227 = vld [vmem:[#allocation2 + $0x2c] sm:$0xf]
    %v228 = vld [vmem:[#allocation2 + $0x30] sm:$0xff]
    %v229 = vld [vmem:[#allocation2 + $0x38] sm:$0xf]
    %v230 = vld [vmem:[#allocation2 + $0x3c] sm:$0xff]
    %v231 = vld [vmem:[#allocation2 + $0x44] sm:$0xf]
    %v232 = vld [vmem:[#allocation2 + $0x48] sm:$0xff]
    %v233 = vld [vmem:[#allocation2 + $0x50] sm:$0xf]
    %v234 = vld [vmem:[#allocation2 + $0x54] sm:$0xff]
    %v235 = vld [vmem:[#allocation2 + $0x5c] sm:$0xf]
    %v236 = vld [vmem:[#allocation2 + $0x60] sm:$0xff]
    %v237 = vld [vmem:[#allocation2 + $0x68] sm:$0xf]
    %v238 = vld [vmem:[#allocation2 + $0x6c] sm:$0xff]
    %v239 = vld [vmem:[#allocation2 + $0x74] sm:$0xf]
    %v240 = vld [vmem:[#allocation2 + $0x78] sm:$0xff]
    %v241 = vld [vmem:[#allocation2 + $0x80] sm:$0xf]
    %v242 = vld [vmem:[#allocation2 + $0x84] sm:$0xff]
    %v243 = vld [vmem:[#allocation2 + $0x8c] sm:$0xf]
    %v244 = vld [vmem:[#allocation2 + $0x90] sm:$0xff]
    %v245 = vld [vmem:[#allocation2 + $0x98] sm:$0xf]
    %v246 = vld [vmem:[#allocation2 + $0x9c] sm:$0xff]
    %v247 = vld [vmem:[#allocation2 + $0xa4] sm:$0xf]
    %v248 = vld [vmem:[#allocation2 + $0xa8] sm:$0xff]
    %v249 = vld [vmem:[#allocation2 + $0xb0] sm:$0xf]
    %v250 = vld [vmem:[#allocation2 + $0xb4] sm:$0xff]
    %v251 = vld [vmem:[#allocation2 + $0xbc] sm:$0xf]
    %v252 = vld [vmem:[%s4] sm:$0x7]
    %v254 = vlaneseq
    %v255 = vshrl.u32 %v254, 7
    %v256 = vsub.s32 0, %v255
    %v257 = vrot.slane %v252, %v256
    %v258 = vlaneseq
    %v259 = vshrl.u32 %v258, 7
    %v260 = vsub.s32 1, %v259
    %v261 = vrot.slane %v252, %v260
    %v262 = vlaneseq
    %v263 = vshrl.u32 %v262, 7
    %v264 = vsub.s32 2, %v263
    %v265 = vrot.slane %v252, %v264
    %v301 = vunpack.c.l.b16 %v220
    %v302 = vunpack.c.h.b16 %v220
    %v303 = vunpack.c.l.b16 %v221
    %v304 = vunpack.c.l.b16 %v222
    %v305 = vunpack.c.h.b16 %v222
    %v306 = vunpack.c.l.b16 %v223
    %v307 = vunpack.c.l.b16 %v224
    %v308 = vunpack.c.h.b16 %v224
    %v309 = vunpack.c.l.b16 %v225
    %v310 = vunpack.c.l.b16 %v226
    %v311 = vunpack.c.h.b16 %v226
    %v312 = vunpack.c.l.b16 %v227
    %v313 = vunpack.c.l.b16 %v228
    %v314 = vunpack.c.h.b16 %v228
    %v315 = vunpack.c.l.b16 %v229
    %v316 = vunpack.c.l.b16 %v230
    %v317 = vunpack.c.h.b16 %v230
    %v318 = vunpack.c.l.b16 %v231
    %v319 = vunpack.c.l.b16 %v232
    %v320 = vunpack.c.h.b16 %v232
    %v321 = vunpack.c.l.b16 %v233
    %v322 = vunpack.c.l.b16 %v234
    %v323 = vunpack.c.h.b16 %v234
    %v324 = vunpack.c.l.b16 %v235
    %v325 = vunpack.c.l.b16 %v236
    %v326 = vunpack.c.h.b16 %v236
    %v327 = vunpack.c.l.b16 %v237
    %v328 = vunpack.c.l.b16 %v238
    %v329 = vunpack.c.h.b16 %v238
    %v330 = vunpack.c.l.b16 %v239
    %v331 = vunpack.c.l.b16 %v240
    %v332 = vunpack.c.h.b16 %v240
    %v333 = vunpack.c.l.b16 %v241
    %v334 = vunpack.c.l.b16 %v242
    %v335 = vunpack.c.h.b16 %v242
    %v336 = vunpack.c.l.b16 %v243
    %v337 = vunpack.c.l.b16 %v244
    %v338 = vunpack.c.h.b16 %v244
    %v339 = vunpack.c.l.b16 %v245
    %v340 = vunpack.c.l.b16 %v246
    %v341 = vunpack.c.h.b16 %v246
    %v342 = vunpack.c.l.b16 %v247
    %v343 = vunpack.c.l.b16 %v248
    %v344 = vunpack.c.h.b16 %v248
    %v345 = vunpack.c.l.b16 %v249
    %v346 = vunpack.c.l.b16 %v250
    %v347 = vunpack.c.h.b16 %v250
    %v348 = vunpack.c.l.b16 %v251
    %v349 = vpack.c.b16 %v304, %v301
    %v350 = vpack.c.b16 %v305, %v302
    %v351 = vpack.c.b16 %v306, %v303
    %v352 = vpack.c.b16 %v310, %v307
    %v353 = vpack.c.b16 %v311, %v308
    %v354 = vpack.c.b16 %v312, %v309
    %v355 = vpack.c.b16 %v316, %v313
    %v356 = vpack.c.b16 %v317, %v314
    %v357 = vpack.c.b16 %v318, %v315
    %v358 = vpack.c.b16 %v322, %v319
    %v359 = vpack.c.b16 %v323, %v320
    %v360 = vpack.c.b16 %v324, %v321
    %v361 = vpack.c.b16 %v328, %v325
    %v362 = vpack.c.b16 %v329, %v326
    %v363 = vpack.c.b16 %v330, %v327
    %v364 = vpack.c.b16 %v334, %v331
    %v365 = vpack.c.b16 %v335, %v332
    %v366 = vpack.c.b16 %v336, %v333
    %v367 = vpack.c.b16 %v340, %v337
    %v368 = vpack.c.b16 %v341, %v338
    %v369 = vpack.c.b16 %v342, %v339
    %v370 = vpack.c.b16 %v346, %v343
    %v371 = vpack.c.b16 %v347, %v344
    %v372 = vpack.c.b16 %v348, %v345
    %397 = vmatprep.subr.bf16.mxu0 %v350
    %398 = vmatpush1.bf16.msra.mxu0 %v349
    %399 = vmatprep.subr.bf16.mxu0 %v353
    %400 = vmatpush1.bf16.msra.mxu0 %v352
    %401 = vmatprep.subr.bf16.mxu0 %v356
    %402 = vmatpush1.bf16.msra.mxu0 %v355
    %403 = vmatprep.subr.bf16.mxu0 %v359
    %404 = vmatpush1.bf16.msra.mxu0 %v358
    %405 = vmatprep.subr.bf16.mxu0 %v362
    %406 = vmatpush1.bf16.msra.mxu0 %v361
    %407 = vmatprep.subr.bf16.mxu0 %v365
    %408 = vmatpush1.bf16.msra.mxu0 %v364
    %409 = vmatprep.subr.bf16.mxu0 %v368
    %410 = vmatpush1.bf16.msra.mxu0 %v367
    %411 = vmatprep.subr.bf16.mxu0 %v371
    %412 = vmatpush1.bf16.msra.mxu0 %v370
    %413 = vmatprep.subr.bf16.mxu0 0
    %414 = vmatpush1.bf16.msra.mxu0 0
    %415 = vmatprep.subr.bf16.mxu0 0
    %416 = vmatpush1.bf16.msra.mxu0 0
    %417 = vmatprep.subr.bf16.mxu0 0
    %418 = vmatpush1.bf16.msra.mxu0 0
    %419 = vmatprep.subr.bf16.mxu0 0
    %420 = vmatpush1.bf16.msra.mxu0 0
    %421 = vmatprep.subr.bf16.mxu0 0
    %422 = vmatpush1.bf16.msra.mxu0 0
    %423 = vmatprep.subr.bf16.mxu0 0
    %424 = vmatpush1.bf16.msra.mxu0 0
    %425 = vmatprep.subr.bf16.mxu0 0
    %426 = vmatpush1.bf16.msra.mxu0 0
    %427 = vmatprep.subr.bf16.mxu0 0
    %428 = vmatpush1.bf16.msra.mxu0 0
    %429 = vmatprep.mubr.bf16.mxu0 0
    %430 = vmatmul.mubr.bf16.gmra.mrb[0].mxu0 %v219
    %v431 = vpop.f32.mrb[0].mxu0
    %v432 = vadd.f32 %v257, %v431
    %v433 = vpop.f32.mrb[0].mxu0
    %v434 = vadd.f32 %v261, %v433
    %v435 = vpop.f32.mrb[0].mxu0
    %v436 = vadd.f32 %v257, %v435
    %v437 = vpop.f32.mrb[0].mxu0
    %v438 = vadd.f32 %v261, %v437
    %439 = vdwg.mxu0
    %440 = vmatprep.subr.bf16.mxu0 0
    %441 = vmatpush1.bf16.msra.mxu0 %v351
    %442 = vmatprep.subr.bf16.mxu0 0
    %443 = vmatpush1.bf16.msra.mxu0 %v354
    %444 = vmatprep.subr.bf16.mxu0 0
    %445 = vmatpush1.bf16.msra.mxu0 %v357
    %446 = vmatprep.subr.bf16.mxu0 0
    %447 = vmatpush1.bf16.msra.mxu0 %v360
    %448 = vmatprep.subr.bf16.mxu0 0
    %449 = vmatpush1.bf16.msra.mxu0 %v363
    %450 = vmatprep.subr.bf16.mxu0 0
    %451 = vmatpush1.bf16.msra.mxu0 %v366
    %452 = vmatprep.subr.bf16.mxu0 0
    %453 = vmatpush1.bf16.msra.mxu0 %v369
    %454 = vmatprep.subr.bf16.mxu0 0
    %455 = vmatpush1.bf16.msra.mxu0 %v372
    %456 = vmatprep.subr.bf16.mxu0 0
    %457 = vmatpush1.bf16.msra.mxu0 0
    %458 = vmatprep.subr.bf16.mxu0 0
    %459 = vmatpush1.bf16.msra.mxu0 0
    %460 = vmatprep.subr.bf16.mxu0 0
    %461 = vmatpush1.bf16.msra.mxu0 0
    %462 = vmatprep.subr.bf16.mxu0 0
    %463 = vmatpush1.bf16.msra.mxu0 0
    %464 = vmatprep.subr.bf16.mxu0 0
    %465 = vmatpush1.bf16.msra.mxu0 0
    %466 = vmatprep.subr.bf16.mxu0 0
    %467 = vmatpush1.bf16.msra.mxu0 0
    %468 = vmatprep.subr.bf16.mxu0 0
    %469 = vmatpush1.bf16.msra.mxu0 0
    %470 = vmatprep.subr.bf16.mxu0 0
    %471 = vmatpush1.bf16.msra.mxu0 0
    %472 = vmatprep.mubr.bf16.mxu0 0
    %473 = vmatmul.mubr.bf16.gmra.mrb[0].mxu0 %v219
    %v474 = vpop.f32.mrb[0].mxu0
    %v475 = vadd.f32 %v265, %v474
    %v476 = vpop.f32.mrb[0].mxu0
    %v477 = vpop.f32.mrb[0].mxu0
    %v478 = vadd.f32 %v265, %v477
    %v479 = vpop.f32.mrb[0].mxu0
    %480 = vdwg.mxu0
    %v481 = vxor.u32 %v432, 2147483648
    %v482 = vxor.u32 %v436, 2147483648
    %v483 = vmul.f32 %v481, 1.442695
    %v484 = vpow.pop %v483
    %v485 = vmul.f32 %v482, 1.442695
    %v486 = vpow.pop %v485
    %v487 = vadd.f32 %v484, 1.0
    %v488 = vadd.f32 %v486, 1.0
    %v489 = vrcp.pop %v487
    %v490 = vmul.f32 1.0, %v489
    %v491 = vrcp.pop %v488
    %v492 = vmul.f32 1.0, %v491
    %v493 = vtanh.pop %v434
    %v494 = vtanh.pop %v438
    %v495 = vxor.u32 %v475, 2147483648
    %v496 = vxor.u32 %v478, 2147483648
    %v497 = vmul.f32 %v495, 1.442695
    %v498 = vpow.pop %v497
    %v499 = vmul.f32 %v496, 1.442695
    %v500 = vpow.pop %v499
    %v501 = vadd.f32 %v498, 1.0
    %v502 = vadd.f32 %v500, 1.0
    %v503 = vrcp.pop %v501
    %v504 = vmul.f32 1.0, %v503
    %v505 = vrcp.pop %v502
    %v506 = vmul.f32 1.0, %v505
    %v507 = vmul.f32 %v490, %v493
    %v508 = vmul.f32 %v492, %v494
    %v509 = vtanh.pop %v507
    %v510 = vtanh.pop %v508
    %v511 = vmul.f32 %v504, %v509
    %v512 = vmul.f32 %v506, %v510
    %v513 = vpack.c.bf16 %v512, %v511
    %s514 = scalar_lea.vmem [#allocation2], 192
    %v515 = vld [vmem:[%s514] sm:$0xff]
    %v516 = vld [vmem:[%s514 + $0x8] sm:$0xf]
    %v517 = vld [vmem:[%s514 + $0xc] sm:$0xff]
    %v518 = vld [vmem:[%s514 + $0x14] sm:$0xf]
    %v519 = vld [vmem:[%s514 + $0x18] sm:$0xff]
    %v520 = vld [vmem:[%s514 + $0x20] sm:$0xf]
    %v521 = vld [vmem:[%s514 + $0x24] sm:$0xff]
    %v522 = vld [vmem:[%s514 + $0x2c] sm:$0xf]
    %v523 = vld [vmem:[%s514 + $0x30] sm:$0xff]
    %v524 = vld [vmem:[%s514 + $0x38] sm:$0xf]
    %v525 = vld [vmem:[%s514 + $0x3c] sm:$0xff]
    %v526 = vld [vmem:[%s514 + $0x44] sm:$0xf]
    %v527 = vld [vmem:[%s514 + $0x48] sm:$0xff]
    %v528 = vld [vmem:[%s514 + $0x50] sm:$0xf]
    %v529 = vld [vmem:[%s514 + $0x54] sm:$0xff]
    %v530 = vld [vmem:[%s514 + $0x5c] sm:$0xf]
    %v531 = vld [vmem:[%s514 + $0x60] sm:$0xff]
    %v532 = vld [vmem:[%s514 + $0x68] sm:$0xf]
    %v533 = vld [vmem:[%s514 + $0x6c] sm:$0xff]
    %v534 = vld [vmem:[%s514 + $0x74] sm:$0xf]
    %v535 = vld [vmem:[%s514 + $0x78] sm:$0xff]
    %v536 = vld [vmem:[%s514 + $0x80] sm:$0xf]
    %v537 = vld [vmem:[%s514 + $0x84] sm:$0xff]
    %v538 = vld [vmem:[%s514 + $0x8c] sm:$0xf]
    %v539 = vld [vmem:[%s514 + $0x90] sm:$0xff]
    %v540 = vld [vmem:[%s514 + $0x98] sm:$0xf]
    %v541 = vld [vmem:[%s514 + $0x9c] sm:$0xff]
    %v542 = vld [vmem:[%s514 + $0xa4] sm:$0xf]
    %v543 = vld [vmem:[%s514 + $0xa8] sm:$0xff]
    %v544 = vld [vmem:[%s514 + $0xb0] sm:$0xf]
    %v545 = vld [vmem:[%s514 + $0xb4] sm:$0xff]
    %v546 = vld [vmem:[%s514 + $0xbc] sm:$0xf]
    %s547 = scalar_lea.vmem %s4, 3
    %v548 = vld [vmem:[%s547] sm:$0x7]
    %v550 = vlaneseq
    %v551 = vshrl.u32 %v550, 7
    %v552 = vsub.s32 0, %v551
    %v553 = vrot.slane %v548, %v552
    %v554 = vlaneseq
    %v555 = vshrl.u32 %v554, 7
    %v556 = vsub.s32 1, %v555
    %v557 = vrot.slane %v548, %v556
    %v558 = vlaneseq
    %v559 = vshrl.u32 %v558, 7
    %v560 = vsub.s32 2, %v559
    %v561 = vrot.slane %v548, %v560
    %v597 = vunpack.c.l.b16 %v515
    %v598 = vunpack.c.h.b16 %v515
    %v599 = vunpack.c.l.b16 %v516
    %v600 = vunpack.c.l.b16 %v517
    %v601 = vunpack.c.h.b16 %v517
    %v602 = vunpack.c.l.b16 %v518
    %v603 = vunpack.c.l.b16 %v519
    %v604 = vunpack.c.h.b16 %v519
    %v605 = vunpack.c.l.b16 %v520
    %v606 = vunpack.c.l.b16 %v521
    %v607 = vunpack.c.h.b16 %v521
    %v608 = vunpack.c.l.b16 %v522
    %v609 = vunpack.c.l.b16 %v523
    %v610 = vunpack.c.h.b16 %v523
    %v611 = vunpack.c.l.b16 %v524
    %v612 = vunpack.c.l.b16 %v525
    %v613 = vunpack.c.h.b16 %v525
    %v614 = vunpack.c.l.b16 %v526
    %v615 = vunpack.c.l.b16 %v527
    %v616 = vunpack.c.h.b16 %v527
    %v617 = vunpack.c.l.b16 %v528
    %v618 = vunpack.c.l.b16 %v529
    %v619 = vunpack.c.h.b16 %v529
    %v620 = vunpack.c.l.b16 %v530
    %v621 = vunpack.c.l.b16 %v531
    %v622 = vunpack.c.h.b16 %v531
    %v623 = vunpack.c.l.b16 %v532
    %v624 = vunpack.c.l.b16 %v533
    %v625 = vunpack.c.h.b16 %v533
    %v626 = vunpack.c.l.b16 %v534
    %v627 = vunpack.c.l.b16 %v535
    %v628 = vunpack.c.h.b16 %v535
    %v629 = vunpack.c.l.b16 %v536
    %v630 = vunpack.c.l.b16 %v537
    %v631 = vunpack.c.h.b16 %v537
    %v632 = vunpack.c.l.b16 %v538
    %v633 = vunpack.c.l.b16 %v539
    %v634 = vunpack.c.h.b16 %v539
    %v635 = vunpack.c.l.b16 %v540
    %v636 = vunpack.c.l.b16 %v541
    %v637 = vunpack.c.h.b16 %v541
    %v638 = vunpack.c.l.b16 %v542
    %v639 = vunpack.c.l.b16 %v543
    %v640 = vunpack.c.h.b16 %v543
    %v641 = vunpack.c.l.b16 %v544
    %v642 = vunpack.c.l.b16 %v545
    %v643 = vunpack.c.h.b16 %v545
    %v644 = vunpack.c.l.b16 %v546
    %v645 = vpack.c.b16 %v600, %v597
    %v646 = vpack.c.b16 %v601, %v598
    %v647 = vpack.c.b16 %v602, %v599
    %v648 = vpack.c.b16 %v606, %v603
    %v649 = vpack.c.b16 %v607, %v604
    %v650 = vpack.c.b16 %v608, %v605
    %v651 = vpack.c.b16 %v612, %v609
    %v652 = vpack.c.b16 %v613, %v610
    %v653 = vpack.c.b16 %v614, %v611
    %v654 = vpack.c.b16 %v618, %v615
    %v655 = vpack.c.b16 %v619, %v616
    %v656 = vpack.c.b16 %v620, %v617
    %v657 = vpack.c.b16 %v624, %v621
    %v658 = vpack.c.b16 %v625, %v622
    %v659 = vpack.c.b16 %v626, %v623
    %v660 = vpack.c.b16 %v630, %v627
    %v661 = vpack.c.b16 %v631, %v628
    %v662 = vpack.c.b16 %v632, %v629
    %v663 = vpack.c.b16 %v636, %v633
    %v664 = vpack.c.b16 %v637, %v634
    %v665 = vpack.c.b16 %v638, %v635
    %v666 = vpack.c.b16 %v642, %v639
    %v667 = vpack.c.b16 %v643, %v640
    %v668 = vpack.c.b16 %v644, %v641
    %693 = vmatprep.subr.bf16.mxu0 %v646
    %694 = vmatpush1.bf16.msra.mxu0 %v645
    %695 = vmatprep.subr.bf16.mxu0 %v649
    %696 = vmatpush1.bf16.msra.mxu0 %v648
    %697 = vmatprep.subr.bf16.mxu0 %v652
    %698 = vmatpush1.bf16.msra.mxu0 %v651
    %699 = vmatprep.subr.bf16.mxu0 %v655
    %700 = vmatpush1.bf16.msra.mxu0 %v654
    %701 = vmatprep.subr.bf16.mxu0 %v658
    %702 = vmatpush1.bf16.msra.mxu0 %v657
    %703 = vmatprep.subr.bf16.mxu0 %v661
    %704 = vmatpush1.bf16.msra.mxu0 %v660
    %705 = vmatprep.subr.bf16.mxu0 %v664
    %706 = vmatpush1.bf16.msra.mxu0 %v663
    %707 = vmatprep.subr.bf16.mxu0 %v667
    %708 = vmatpush1.bf16.msra.mxu0 %v666
    %709 = vmatprep.subr.bf16.mxu0 0
    %710 = vmatpush1.bf16.msra.mxu0 0
    %711 = vmatprep.subr.bf16.mxu0 0
    %712 = vmatpush1.bf16.msra.mxu0 0
    %713 = vmatprep.subr.bf16.mxu0 0
    %714 = vmatpush1.bf16.msra.mxu0 0
    %715 = vmatprep.subr.bf16.mxu0 0
    %716 = vmatpush1.bf16.msra.mxu0 0
    %717 = vmatprep.subr.bf16.mxu0 0
    %718 = vmatpush1.bf16.msra.mxu0 0
    %719 = vmatprep.subr.bf16.mxu0 0
    %720 = vmatpush1.bf16.msra.mxu0 0
    %721 = vmatprep.subr.bf16.mxu0 0
    %722 = vmatpush1.bf16.msra.mxu0 0
    %723 = vmatprep.subr.bf16.mxu0 0
    %724 = vmatpush1.bf16.msra.mxu0 0
    %725 = vmatprep.mubr.bf16.mxu0 0
    %726 = vmatmul.mubr.bf16.gmra.mrb[0].mxu0 %v513
    %v727 = vpop.f32.mrb[0].mxu0
    %v728 = vadd.f32 %v553, %v727
    %v729 = vpop.f32.mrb[0].mxu0
    %v730 = vadd.f32 %v557, %v729
    %v731 = vpop.f32.mrb[0].mxu0
    %v732 = vadd.f32 %v553, %v731
    %v733 = vpop.f32.mrb[0].mxu0
    %v734 = vadd.f32 %v557, %v733
    %735 = vdwg.mxu0
    %736 = vmatprep.subr.bf16.mxu0 0
    %737 = vmatpush1.bf16.msra.mxu0 %v647
    %738 = vmatprep.subr.bf16.mxu0 0
    %739 = vmatpush1.bf16.msra.mxu0 %v650
    %740 = vmatprep.subr.bf16.mxu0 0
    %741 = vmatpush1.bf16.msra.mxu0 %v653
    %742 = vmatprep.subr.bf16.mxu0 0
    %743 = vmatpush1.bf16.msra.mxu0 %v656
    %744 = vmatprep.subr.bf16.mxu0 0
    %745 = vmatpush1.bf16.msra.mxu0 %v659
    %746 = vmatprep.subr.bf16.mxu0 0
    %747 = vmatpush1.bf16.msra.mxu0 %v662
    %748 = vmatprep.subr.bf16.mxu0 0
    %749 = vmatpush1.bf16.msra.mxu0 %v665
    %750 = vmatprep.subr.bf16.mxu0 0
    %751 = vmatpush1.bf16.msra.mxu0 %v668
    %752 = vmatprep.subr.bf16.mxu0 0
    %753 = vmatpush1.bf16.msra.mxu0 0
    %754 = vmatprep.subr.bf16.mxu0 0
    %755 = vmatpush1.bf16.msra.mxu0 0
    %756 = vmatprep.subr.bf16.mxu0 0
    %757 = vmatpush1.bf16.msra.mxu0 0
    %758 = vmatprep.subr.bf16.mxu0 0
    %759 = vmatpush1.bf16.msra.mxu0 0
    %760 = vmatprep.subr.bf16.mxu0 0
    %761 = vmatpush1.bf16.msra.mxu0 0
    %762 = vmatprep.subr.bf16.mxu0 0
    %763 = vmatpush1.bf16.msra.mxu0 0
    %764 = vmatprep.subr.bf16.mxu0 0
    %765 = vmatpush1.bf16.msra.mxu0 0
    %766 = vmatprep.subr.bf16.mxu0 0
    %767 = vmatpush1.bf16.msra.mxu0 0
    %768 = vmatprep.mubr.bf16.mxu0 0
    %769 = vmatmul.mubr.bf16.gmra.mrb[0].mxu0 %v513
    %v770 = vpop.f32.mrb[0].mxu0
    %v771 = vadd.f32 %v561, %v770
    %v772 = vpop.f32.mrb[0].mxu0
    %v773 = vpop.f32.mrb[0].mxu0
    %v774 = vadd.f32 %v561, %v773
    %v775 = vpop.f32.mrb[0].mxu0
    %776 = vdwg.mxu0
    %v777 = vxor.u32 %v728, 2147483648
    %v778 = vxor.u32 %v732, 2147483648
    %v779 = vmul.f32 %v777, 1.442695
    %v780 = vpow.pop %v779
    %v781 = vmul.f32 %v778, 1.442695
    %v782 = vpow.pop %v781
    %v783 = vadd.f32 %v780, 1.0
    %v784 = vadd.f32 %v782, 1.0
    %v785 = vrcp.pop %v783
    %v786 = vmul.f32 1.0, %v785
    %v787 = vrcp.pop %v784
    %v788 = vmul.f32 1.0, %v787
    %v789 = vtanh.pop %v730
    %v790 = vtanh.pop %v734
    %v791 = vxor.u32 %v771, 2147483648
    %v792 = vxor.u32 %v774, 2147483648
    %v793 = vmul.f32 %v791, 1.442695
    %v794 = vpow.pop %v793
    %v795 = vmul.f32 %v792, 1.442695
    %v796 = vpow.pop %v795
    %v797 = vadd.f32 %v794, 1.0
    %v798 = vadd.f32 %v796, 1.0
    %v799 = vrcp.pop %v797
    %v800 = vmul.f32 1.0, %v799
    %v801 = vrcp.pop %v798
    %v802 = vmul.f32 1.0, %v801
    %v803 = vmul.f32 %v786, %v789
    %v804 = vmul.f32 %v788, %v790
    %v805 = vtanh.pop %v803
    %v806 = vtanh.pop %v804
    %v807 = vmul.f32 %v800, %v805
    %v808 = vmul.f32 %v802, %v806
    %v809 = vpack.c.bf16 %v808, %v807
    %s810 = scalar_lea.vmem [#allocation2], 384
    %v811 = vld [vmem:[%s810] sm:$0xff]
    %v812 = vld [vmem:[%s810 + $0x8] sm:$0xf]
    %v813 = vld [vmem:[%s810 + $0xc] sm:$0xff]
    %v814 = vld [vmem:[%s810 + $0x14] sm:$0xf]
    %v815 = vld [vmem:[%s810 + $0x18] sm:$0xff]
    %v816 = vld [vmem:[%s810 + $0x20] sm:$0xf]
    %v817 = vld [vmem:[%s810 + $0x24] sm:$0xff]
    %v818 = vld [vmem:[%s810 + $0x2c] sm:$0xf]
    %v819 = vld [vmem:[%s810 + $0x30] sm:$0xff]
    %v820 = vld [vmem:[%s810 + $0x38] sm:$0xf]
    %v821 = vld [vmem:[%s810 + $0x3c] sm:$0xff]
    %v822 = vld [vmem:[%s810 + $0x44] sm:$0xf]
    %v823 = vld [vmem:[%s810 + $0x48] sm:$0xff]
    %v824 = vld [vmem:[%s810 + $0x50] sm:$0xf]
    %v825 = vld [vmem:[%s810 + $0x54] sm:$0xff]
    %v826 = vld [vmem:[%s810 + $0x5c] sm:$0xf]
    %v827 = vld [vmem:[%s810 + $0x60] sm:$0xff]
    %v828 = vld [vmem:[%s810 + $0x68] sm:$0xf]
    %v829 = vld [vmem:[%s810 + $0x6c] sm:$0xff]
    %v830 = vld [vmem:[%s810 + $0x74] sm:$0xf]
    %v831 = vld [vmem:[%s810 + $0x78] sm:$0xff]
    %v832 = vld [vmem:[%s810 + $0x80] sm:$0xf]
    %v833 = vld [vmem:[%s810 + $0x84] sm:$0xff]
    %v834 = vld [vmem:[%s810 + $0x8c] sm:$0xf]
    %v835 = vld [vmem:[%s810 + $0x90] sm:$0xff]
    %v836 = vld [vmem:[%s810 + $0x98] sm:$0xf]
    %v837 = vld [vmem:[%s810 + $0x9c] sm:$0xff]
    %v838 = vld [vmem:[%s810 + $0xa4] sm:$0xf]
    %v839 = vld [vmem:[%s810 + $0xa8] sm:$0xff]
    %v840 = vld [vmem:[%s810 + $0xb0] sm:$0xf]
    %v841 = vld [vmem:[%s810 + $0xb4] sm:$0xff]
    %v842 = vld [vmem:[%s810 + $0xbc] sm:$0xf]
    %s843 = scalar_lea.vmem %s4, 6
    %v844 = vld [vmem:[%s843] sm:$0x7]
    %v846 = vlaneseq
    %v847 = vshrl.u32 %v846, 7
    %v848 = vsub.s32 0, %v847
    %v849 = vrot.slane %v844, %v848
    %v850 = vlaneseq
    %v851 = vshrl.u32 %v850, 7
    %v852 = vsub.s32 1, %v851
    %v853 = vrot.slane %v844, %v852
    %v854 = vlaneseq
    %v855 = vshrl.u32 %v854, 7
    %v856 = vsub.s32 2, %v855
    %v857 = vrot.slane %v844, %v856
    %v893 = vunpack.c.l.b16 %v811
    %v894 = vunpack.c.h.b16 %v811
    %v895 = vunpack.c.l.b16 %v812
    %v896 = vunpack.c.l.b16 %v813
    %v897 = vunpack.c.h.b16 %v813
    %v898 = vunpack.c.l.b16 %v814
    %v899 = vunpack.c.l.b16 %v815
    %v900 = vunpack.c.h.b16 %v815
    %v901 = vunpack.c.l.b16 %v816
    %v902 = vunpack.c.l.b16 %v817
    %v903 = vunpack.c.h.b16 %v817
    %v904 = vunpack.c.l.b16 %v818
    %v905 = vunpack.c.l.b16 %v819
    %v906 = vunpack.c.h.b16 %v819
    %v907 = vunpack.c.l.b16 %v820
    %v908 = vunpack.c.l.b16 %v821
    %v909 = vunpack.c.h.b16 %v821
    %v910 = vunpack.c.l.b16 %v822
    %v911 = vunpack.c.l.b16 %v823
    %v912 = vunpack.c.h.b16 %v823
    %v913 = vunpack.c.l.b16 %v824
    %v914 = vunpack.c.l.b16 %v825
    %v915 = vunpack.c.h.b16 %v825
    %v916 = vunpack.c.l.b16 %v826
    %v917 = vunpack.c.l.b16 %v827
    %v918 = vunpack.c.h.b16 %v827
    %v919 = vunpack.c.l.b16 %v828
    %v920 = vunpack.c.l.b16 %v829
    %v921 = vunpack.c.h.b16 %v829
    %v922 = vunpack.c.l.b16 %v830
    %v923 = vunpack.c.l.b16 %v831
    %v924 = vunpack.c.h.b16 %v831
    %v925 = vunpack.c.l.b16 %v832
    %v926 = vunpack.c.l.b16 %v833
    %v927 = vunpack.c.h.b16 %v833
    %v928 = vunpack.c.l.b16 %v834
    %v929 = vunpack.c.l.b16 %v835
    %v930 = vunpack.c.h.b16 %v835
    %v931 = vunpack.c.l.b16 %v836
    %v932 = vunpack.c.l.b16 %v837
    %v933 = vunpack.c.h.b16 %v837
    %v934 = vunpack.c.l.b16 %v838
    %v935 = vunpack.c.l.b16 %v839
    %v936 = vunpack.c.h.b16 %v839
    %v937 = vunpack.c.l.b16 %v840
    %v938 = vunpack.c.l.b16 %v841
    %v939 = vunpack.c.h.b16 %v841
    %v940 = vunpack.c.l.b16 %v842
    %v941 = vpack.c.b16 %v896, %v893
    %v942 = vpack.c.b16 %v897, %v894
    %v943 = vpack.c.b16 %v898, %v895
    %v944 = vpack.c.b16 %v902, %v899
    %v945 = vpack.c.b16 %v903, %v900
    %v946 = vpack.c.b16 %v904, %v901
    %v947 = vpack.c.b16 %v908, %v905
    %v948 = vpack.c.b16 %v909, %v906
    %v949 = vpack.c.b16 %v910, %v907
    %v950 = vpack.c.b16 %v914, %v911
    %v951 = vpack.c.b16 %v915, %v912
    %v952 = vpack.c.b16 %v916, %v913
    %v953 = vpack.c.b16 %v920, %v917
    %v954 = vpack.c.b16 %v921, %v918
    %v955 = vpack.c.b16 %v922, %v919
    %v956 = vpack.c.b16 %v926, %v923
    %v957 = vpack.c.b16 %v927, %v924
    %v958 = vpack.c.b16 %v928, %v925
    %v959 = vpack.c.b16 %v932, %v929
    %v960 = vpack.c.b16 %v933, %v930
    %v961 = vpack.c.b16 %v934, %v931
    %v962 = vpack.c.b16 %v938, %v935
    %v963 = vpack.c.b16 %v939, %v936
    %v964 = vpack.c.b16 %v940, %v937
    %989 = vmatprep.subr.bf16.mxu0 %v942
    %990 = vmatpush1.bf16.msra.mxu0 %v941
    %991 = vmatprep.subr.bf16.mxu0 %v945
    %992 = vmatpush1.bf16.msra.mxu0 %v944
    %993 = vmatprep.subr.bf16.mxu0 %v948
    %994 = vmatpush1.bf16.msra.mxu0 %v947
    %995 = vmatprep.subr.bf16.mxu0 %v951
    %996 = vmatpush1.bf16.msra.mxu0 %v950
    %997 = vmatprep.subr.bf16.mxu0 %v954
    %998 = vmatpush1.bf16.msra.mxu0 %v953
    %999 = vmatprep.subr.bf16.mxu0 %v957
    %1000 = vmatpush1.bf16.msra.mxu0 %v956
    %1001 = vmatprep.subr.bf16.mxu0 %v960
    %1002 = vmatpush1.bf16.msra.mxu0 %v959
    %1003 = vmatprep.subr.bf16.mxu0 %v963
    %1004 = vmatpush1.bf16.msra.mxu0 %v962
    %1005 = vmatprep.subr.bf16.mxu0 0
    %1006 = vmatpush1.bf16.msra.mxu0 0
    %1007 = vmatprep.subr.bf16.mxu0 0
    %1008 = vmatpush1.bf16.msra.mxu0 0
    %1009 = vmatprep.subr.bf16.mxu0 0
    %1010 = vmatpush1.bf16.msra.mxu0 0
    %1011 = vmatprep.subr.bf16.mxu0 0
    %1012 = vmatpush1.bf16.msra.mxu0 0
    %1013 = vmatprep.subr.bf16.mxu0 0
    %1014 = vmatpush1.bf16.msra.mxu0 0
    %1015 = vmatprep.subr.bf16.mxu0 0
    %1016 = vmatpush1.bf16.msra.mxu0 0
    %1017 = vmatprep.subr.bf16.mxu0 0
    %1018 = vmatpush1.bf16.msra.mxu0 0
    %1019 = vmatprep.subr.bf16.mxu0 0
    %1020 = vmatpush1.bf16.msra.mxu0 0
    %1021 = vmatprep.mubr.bf16.mxu0 0
    %1022 = vmatmul.mubr.bf16.gmra.mrb[0].mxu0 %v809
    %v1023 = vpop.f32.mrb[0].mxu0
    %v1024 = vadd.f32 %v849, %v1023
    %v1025 = vpop.f32.mrb[0].mxu0
    %v1026 = vadd.f32 %v853, %v1025
    %v1027 = vpop.f32.mrb[0].mxu0
    %v1028 = vadd.f32 %v849, %v1027
    %v1029 = vpop.f32.mrb[0].mxu0
    %v1030 = vadd.f32 %v853, %v1029
    %1031 = vdwg.mxu0
    %1032 = vmatprep.subr.bf16.mxu0 0
    %1033 = vmatpush1.bf16.msra.mxu0 %v943
    %1034 = vmatprep.subr.bf16.mxu0 0
    %1035 = vmatpush1.bf16.msra.mxu0 %v946
    %1036 = vmatprep.subr.bf16.mxu0 0
    %1037 = vmatpush1.bf16.msra.mxu0 %v949
    %1038 = vmatprep.subr.bf16.mxu0 0
    %1039 = vmatpush1.bf16.msra.mxu0 %v952
    %1040 = vmatprep.subr.bf16.mxu0 0
    %1041 = vmatpush1.bf16.msra.mxu0 %v955
    %1042 = vmatprep.subr.bf16.mxu0 0
    %1043 = vmatpush1.bf16.msra.mxu0 %v958
    %1044 = vmatprep.subr.bf16.mxu0 0
    %1045 = vmatpush1.bf16.msra.mxu0 %v961
    %1046 = vmatprep.subr.bf16.mxu0 0
    %1047 = vmatpush1.bf16.msra.mxu0 %v964
    %1048 = vmatprep.subr.bf16.mxu0 0
    %1049 = vmatpush1.bf16.msra.mxu0 0
    %1050 = vmatprep.subr.bf16.mxu0 0
    %1051 = vmatpush1.bf16.msra.mxu0 0
    %1052 = vmatprep.subr.bf16.mxu0 0
    %1053 = vmatpush1.bf16.msra.mxu0 0
    %1054 = vmatprep.subr.bf16.mxu0 0
    %1055 = vmatpush1.bf16.msra.mxu0 0
    %1056 = vmatprep.subr.bf16.mxu0 0
    %1057 = vmatpush1.bf16.msra.mxu0 0
    %1058 = vmatprep.subr.bf16.mxu0 0
    %1059 = vmatpush1.bf16.msra.mxu0 0
    %1060 = vmatprep.subr.bf16.mxu0 0
    %1061 = vmatpush1.bf16.msra.mxu0 0
    %1062 = vmatprep.subr.bf16.mxu0 0
    %1063 = vmatpush1.bf16.msra.mxu0 0
    %1064 = vmatprep.mubr.bf16.mxu0 0
    %1065 = vmatmul.mubr.bf16.gmra.mrb[0].mxu0 %v809
    %v1066 = vpop.f32.mrb[0].mxu0
    %v1067 = vadd.f32 %v857, %v1066
    %v1068 = vpop.f32.mrb[0].mxu0
    %v1069 = vpop.f32.mrb[0].mxu0
    %v1070 = vadd.f32 %v857, %v1069
    %v1071 = vpop.f32.mrb[0].mxu0
    %1072 = vdwg.mxu0
    %v1073 = vxor.u32 %v1024, 2147483648
    %v1074 = vxor.u32 %v1028, 2147483648
    %v1075 = vmul.f32 %v1073, 1.442695
    %v1076 = vpow.pop %v1075
    %v1077 = vmul.f32 %v1074, 1.442695
    %v1078 = vpow.pop %v1077
    %v1079 = vadd.f32 %v1076, 1.0
    %v1080 = vadd.f32 %v1078, 1.0
    %v1081 = vrcp.pop %v1079
    %v1082 = vmul.f32 1.0, %v1081
    %v1083 = vrcp.pop %v1080
    %v1084 = vmul.f32 1.0, %v1083
    %v1085 = vtanh.pop %v1026
    %v1086 = vtanh.pop %v1030
    %v1087 = vxor.u32 %v1067, 2147483648
    %v1088 = vxor.u32 %v1070, 2147483648
    %v1089 = vmul.f32 %v1087, 1.442695
    %v1090 = vpow.pop %v1089
    %v1091 = vmul.f32 %v1088, 1.442695
    %v1092 = vpow.pop %v1091
    %v1093 = vadd.f32 %v1090, 1.0
    %v1094 = vadd.f32 %v1092, 1.0
    %v1095 = vrcp.pop %v1093
    %v1096 = vmul.f32 1.0, %v1095
    %v1097 = vrcp.pop %v1094
    %v1098 = vmul.f32 1.0, %v1097
    %v1099 = vmul.f32 %v1082, %v1085
    %v1100 = vmul.f32 %v1084, %v1086
    %v1101 = vtanh.pop %v1099
    %v1102 = vtanh.pop %v1100
    %v1103 = vmul.f32 %v1096, %v1101
    %v1104 = vmul.f32 %v1098, %v1102
    %v1105 = vpack.c.bf16 %v1104, %v1103
    %v1106 = vld [vmem:[#allocation4] sm:$0xf]
    %v1107 = vld [vmem:[#allocation4 + $0x4] sm:$0xf]
    %v1108 = vld [vmem:[#allocation4 + $0x8] sm:$0xf]
    %v1109 = vld [vmem:[#allocation4 + $0xc] sm:$0xf]
    %v1110 = vld [vmem:[#allocation4 + $0x10] sm:$0xf]
    %v1111 = vld [vmem:[#allocation4 + $0x14] sm:$0xf]
    %v1112 = vld [vmem:[#allocation4 + $0x18] sm:$0xf]
    %v1113 = vld [vmem:[#allocation4 + $0x1c] sm:$0xf]
    %v1114 = vld [vmem:[#allocation4 + $0x20] sm:$0xf]
    %v1115 = vld [vmem:[#allocation4 + $0x24] sm:$0xf]
    %v1116 = vld [vmem:[#allocation4 + $0x28] sm:$0xf]
    %v1117 = vld [vmem:[#allocation4 + $0x2c] sm:$0xf]
    %v1118 = vld [vmem:[#allocation4 + $0x30] sm:$0xf]
    %v1119 = vld [vmem:[#allocation4 + $0x34] sm:$0xf]
    %v1120 = vld [vmem:[#allocation4 + $0x38] sm:$0xf]
    %v1121 = vld [vmem:[#allocation4 + $0x3c] sm:$0xf]
    %v1122 = vld [vmem:[%s6] sm:$0x1]
    %v1124 = vlaneseq
    %v1125 = vshrl.u32 %v1124, 7
    %v1126 = vsub.s32 0, %v1125
    %v1127 = vrot.slane %v1122, %v1126
    %v1145 = vunpack.c.l.b16 %v1106
    %v1146 = vunpack.c.l.b16 %v1107
    %v1147 = vunpack.c.l.b16 %v1108
    %v1148 = vunpack.c.l.b16 %v1109
    %v1149 = vunpack.c.l.b16 %v1110
    %v1150 = vunpack.c.l.b16 %v1111
    %v1151 = vunpack.c.l.b16 %v1112
    %v1152 = vunpack.c.l.b16 %v1113
    %v1153 = vunpack.c.l.b16 %v1114
    %v1154 = vunpack.c.l.b16 %v1115
    %v1155 = vunpack.c.l.b16 %v1116
    %v1156 = vunpack.c.l.b16 %v1117
    %v1157 = vunpack.c.l.b16 %v1118
    %v1158 = vunpack.c.l.b16 %v1119
    %v1159 = vunpack.c.l.b16 %v1120
    %v1160 = vunpack.c.l.b16 %v1121
    %v1161 = vpack.c.b16 %v1146, %v1145
    %v1162 = vpack.c.b16 %v1148, %v1147
    %v1163 = vpack.c.b16 %v1150, %v1149
    %v1164 = vpack.c.b16 %v1152, %v1151
    %v1165 = vpack.c.b16 %v1154, %v1153
    %v1166 = vpack.c.b16 %v1156, %v1155
    %v1167 = vpack.c.b16 %v1158, %v1157
    %v1168 = vpack.c.b16 %v1160, %v1159
    %1177 = vmatprep.subr.bf16.mxu0 0
    %1178 = vmatpush1.bf16.msra.mxu0 %v1161
    %1179 = vmatprep.subr.bf16.mxu0 0
    %1180 = vmatpush1.bf16.msra.mxu0 %v1162
    %1181 = vmatprep.subr.bf16.mxu0 0
    %1182 = vmatpush1.bf16.msra.mxu0 %v1163
    %1183 = vmatprep.subr.bf16.mxu0 0
    %1184 = vmatpush1.bf16.msra.mxu0 %v1164
    %1185 = vmatprep.subr.bf16.mxu0 0
    %1186 = vmatpush1.bf16.msra.mxu0 %v1165
    %1187 = vmatprep.subr.bf16.mxu0 0
    %1188 = vmatpush1.bf16.msra.mxu0 %v1166
    %1189 = vmatprep.subr.bf16.mxu0 0
    %1190 = vmatpush1.bf16.msra.mxu0 %v1167
    %1191 = vmatprep.subr.bf16.mxu0 0
    %1192 = vmatpush1.bf16.msra.mxu0 %v1168
    %1193 = vmatprep.subr.bf16.mxu0 0
    %1194 = vmatpush1.bf16.msra.mxu0 0
    %1195 = vmatprep.subr.bf16.mxu0 0
    %1196 = vmatpush1.bf16.msra.mxu0 0
    %1197 = vmatprep.subr.bf16.mxu0 0
    %1198 = vmatpush1.bf16.msra.mxu0 0
    %1199 = vmatprep.subr.bf16.mxu0 0
    %1200 = vmatpush1.bf16.msra.mxu0 0
    %1201 = vmatprep.subr.bf16.mxu0 0
    %1202 = vmatpush1.bf16.msra.mxu0 0
    %1203 = vmatprep.subr.bf16.mxu0 0
    %1204 = vmatpush1.bf16.msra.mxu0 0
    %1205 = vmatprep.subr.bf16.mxu0 0
    %1206 = vmatpush1.bf16.msra.mxu0 0
    %1207 = vmatprep.subr.bf16.mxu0 0
    %1208 = vmatpush1.bf16.msra.mxu0 0
    %1209 = vmatprep.mubr.bf16.mxu0 0
    %1210 = vmatmul.mubr.bf16.gmra.mrb[0].mxu0 %v1105
    %v1211 = vpop.f32.mrb[0].mxu0
    %v1212 = vadd.f32 %v1127, %v1211
    %v1213 = vpop.f32.mrb[0].mxu0
    %v1214 = vpop.f32.mrb[0].mxu0
    %v1215 = vadd.f32 %v1127, %v1214
    %v1216 = vpop.f32.mrb[0].mxu0
    %1217 = vdwg.mxu0
    %1218 = vxpose.xlu0.b32.start [1/16] %v1212, 128
    %1219 = vxpose.xlu0.b32.cont [2/16] %v1215, 128
    %1220 = vxpose.xlu0.b32.cont [3/16] 0.0, 128
    %1221 = vxpose.xlu0.b32.cont [4/16] 0.0, 128
    %1222 = vxpose.xlu0.b32.cont [5/16] 0.0, 128
    %1223 = vxpose.xlu0.b32.cont [6/16] 0.0, 128
    %1224 = vxpose.xlu0.b32.cont [7/16] 0.0, 128
    %1225 = vxpose.xlu0.b32.cont [8/16] 0.0, 128
    %1226 = vxpose.xlu0.b32.cont [9/16] 0.0, 128
    %1227 = vxpose.xlu0.b32.cont [10/16] 0.0, 128
    %1228 = vxpose.xlu0.b32.cont [11/16] 0.0, 128
    %1229 = vxpose.xlu0.b32.cont [12/16] 0.0, 128
    %1230 = vxpose.xlu0.b32.cont [13/16] 0.0, 128
    %1231 = vxpose.xlu0.b32.cont [14/16] 0.0, 128
    %1232 = vxpose.xlu0.b32.cont [15/16] 0.0, 128
    %1233 = vxpose.xlu0.b32.end [16/16] 0.0, 128
    %v1234 = vpop.trf.xlu0
    %v1235 = vpop.trf.xlu0
    %v1236 = vpop.trf.xlu0
    %v1237 = vpop.trf.xlu0
    %v1238 = vpop.trf.xlu0
    %v1239 = vpop.trf.xlu0
    %v1240 = vpop.trf.xlu0
    %v1241 = vpop.trf.xlu0
    %v1242 = vpop.trf.xlu0
    %v1243 = vpop.trf.xlu0
    %v1244 = vpop.trf.xlu0
    %v1245 = vpop.trf.xlu0
    %v1246 = vpop.trf.xlu0
    %v1247 = vpop.trf.xlu0
    %v1248 = vpop.trf.xlu0
    %v1249 = vpop.trf.xlu0
    %v1250 = vxor.u32 %v1234, 2147483648
    %v1251 = vmul.f32 %v1250, 1.442695
    %v1252 = vpow.pop %v1251
    %v1253 = vadd.f32 %v1252, 1.0
    %v1254 = vrcp.pop %v1253
    %v1255 = vmul.f32 1.0, %v1254
    %1256 = vst.msk [vmem:[%s7] sm:$0xff] %vm99, %v1255
    // Predicated region
    $region38: #{lstm_model_forward.1} parent=1 // pred_check
      _
    $region39: #{lstm_model_forward.1} parent=1 // pred_check_branch
      %1258 = sbr.rel (0) target = $region41
    $region40: #{lstm_model_forward.1} parent=1 // pred_region
      _
    $region41: #{lstm_model_forward.1} parent=1 // pred_fallthru
      _
    // Predicated region
    $region42: #{lstm_model_forward.1} parent=1 // pred_check
      _
    $region43: #{lstm_model_forward.1} parent=1 // pred_check_branch
      %1260 = sbr.rel (0) target = $region45
    $region44: #{lstm_model_forward.1} parent=1 // pred_region
      _
    $region45: #{lstm_model_forward.1} parent=1 // pred_fallthru
      _
    %1261 = vsyncpa [#allocation3], 1
    %1262 = vsyncpa [#allocation5], 1

</llo_original>
